<compile_context>
chip_gen: v7x
topology: tpu7x:2x2x1
jax: 0.10.0
libtpu: 0.0.40
codegen_flags: <defaults>
</compile_context>

<pallas_src>
import functools
import math

import jax
import jax.numpy as jnp
from jax.experimental import pallas as pl
from jax.experimental.pallas import tpu as pltpu


def _fpr_loss_kernel(fnr_ref, y_pred_ref, y_true_ref, partial_ref, *,
                     true_data_count, neg_bf_mem_ln2, epsilon,
                     tile_rows, lane_width, tail_valid, needs_mask,
                     soft_labels):
    x = y_pred_ref[...].astype(jnp.float32)
    yt = y_true_ref[...].astype(jnp.float32)

    # Scalar hoist: c = true_data_count * val_fnr (val_fnr prefetched to SMEM).
    c = jnp.float32(true_data_count) * fnr_ref[0]

    # sigmoid(x) == 0.5*(tanh(0.5*x)+1): a single EUP op.
    yp = 0.5 * (jnp.tanh(0.5 * x) + 1.0)

    one_minus_yt = 1.0 - yt
    denom = yp * one_minus_yt + c                     # == yp - yp*yt + c
    denom = jnp.maximum(denom, jnp.float32(epsilon))

    # torch.pow(2, -(bf_memory/denom * ln2)) == exp2(-(bf_memory*ln2) / denom).
    inv_denom = pl.reciprocal(denom, approx=True)     # single EUP vrcp
    bf_rate = jnp.exp2(jnp.float32(neg_bf_mem_ln2) * inv_denom)
    # TODO(synk): torch raises on NaN in bf_rate; there is no in-kernel raise on TPU.
    bf_rate = jnp.clip(bf_rate, jnp.float32(epsilon), jnp.float32(1.0 - epsilon))

    yp_adj = jnp.where(yp < 0.5, yp + bf_rate * 0.5, yp)

    if soft_labels:
        bce = -(yt * jnp.log(yp_adj) + one_minus_yt * jnp.log(1.0 - yp_adj))
    else:
        # Hard 0/1 labels: one log per element instead of two.
        bce = -jnp.log(jnp.where(yt >= 0.5, yp_adj, 1.0 - yp_adj))

    def fold(v):
        # Sublane-wise fold of the (tile_rows, W) tile into one (8, W)
        # lane-dense partial-sum slab (pure VPU adds); the tiny cross-lane
        # reduce + mean happens once in the wrapper.
        return jnp.sum(v.reshape(tile_rows // 8, 8, lane_width), axis=0)

    if needs_mask:
        i = pl.program_id(0)
        last = pl.num_programs(0) - 1

        @pl.when(i != last)
        def _():
            partial_ref[...] = fold(bce)

        @pl.when(i == last)
        def _():
            # Only the last block contains padded elements; mask by local
            # flat index against the (static) number of valid tail elements.
            row = jax.lax.broadcasted_iota(jnp.int32, bce.shape, 0)
            col = jax.lax.broadcasted_iota(jnp.int32, bce.shape, 1)
            local_flat = row * lane_width + col
            masked = jnp.where(local_flat < tail_valid, bce, 0.0)
            partial_ref[...] = fold(masked)
    else:
        partial_ref[...] = fold(bce)


def _pick_lane_width(n_elems):
    # Lane-dense slab width: largest power-of-two multiple of 128 (<=1024)
    # that still gives a few full rows of data.
    w = 1024
    while w > 128 and n_elems < w * 8:
        w //= 2
    return w


def _pick_tile_rows(n_rows, lane_width, itemsize, *,
                    target_bytes=2 << 20, max_rows=8192):
    # ~2 MiB blocks per input (dtype-aware); 2 inputs x 2 pipeline buffers
    # ~= 8 MiB VMEM, safe on every generation.
    rows = (target_bytes // (lane_width * itemsize)) // 8 * 8
    rows = max(8, min(rows, max_rows))
    rows_pad = ((n_rows + 7) // 8) * 8
    rows = min(rows, rows_pad)

    # Keep >= ~8 grid blocks on large problems so v7x's 2 TensorCores both
    # get work and the double-buffer pipeline stays full -- but only if each
    # block stays >= ~256 KiB per input (avoid tiny-DMA overhead).
    target_blocks = 8
    min_cap_rows = max(8, ((256 * 1024) // (lane_width * itemsize)) // 8 * 8)
    if rows_pad >= target_blocks * min_cap_rows:
        cap = max(min_cap_rows, (rows_pad // target_blocks) // 8 * 8)
        rows = min(rows, cap)
    return rows


def fpr_loss_1(y_pred, y_true, val_fnr, *, true_data_count, bf_memory,
               epsilon=1e-8, soft_labels=True, tile_rows=None,
               lane_width=None):
    if bf_memory <= 0:
        raise ValueError("memory is zero")
    assert y_pred.shape == y_true.shape

    n = int(math.prod(y_pred.shape)) if y_pred.ndim > 0 else 1

    if lane_width is None:
        lane_width = _pick_lane_width(n)
    assert lane_width % 128 == 0

    n_rows = -(-n // lane_width)
    in_itemsize = max(jnp.dtype(y_pred.dtype).itemsize,
                      jnp.dtype(y_true.dtype).itemsize)
    if tile_rows is None:
        tile_rows = _pick_tile_rows(n_rows, lane_width, in_itemsize)
    assert tile_rows % 8 == 0

    num_blocks = -(-n_rows // tile_rows)
    n_padded = num_blocks * tile_rows * lane_width
    needs_mask = n_padded != n
    # Valid elements inside the last block (static Python int).
    tail_valid = n - (num_blocks - 1) * tile_rows * lane_width

    def to_slab(a):
        flat = a.reshape((-1,))
        if n_padded != n:
            flat = jnp.pad(flat, (0, n_padded - n))
        return flat.reshape((num_blocks * tile_rows, lane_width))

    yp_slab = to_slab(y_pred)
    yt_slab = to_slab(y_true)
    fnr_arr = jnp.asarray(val_fnr, jnp.float32).reshape((1,))

    kernel = functools.partial(
        _fpr_loss_kernel,
        true_data_count=float(true_data_count),
        neg_bf_mem_ln2=-(float(bf_memory) * math.log(2.0)),
        epsilon=float(epsilon),
        tile_rows=tile_rows,
        lane_width=lane_width,
        tail_valid=tail_valid,
        needs_mask=needs_mask,
        soft_labels=soft_labels,
    )

    # Advisory cost estimate (post approx-recip / single-log changes).
    n_trans_per_elem = 3 + (2 if soft_labels else 1)  # tanh, vrcp, exp2 + log(s)
    in_bytes_per_elem = (jnp.dtype(y_pred.dtype).itemsize
                         + jnp.dtype(y_true.dtype).itemsize)
    cost = pl.CostEstimate(
        flops=16 * n_padded,
        transcendentals=n_trans_per_elem * n_padded,
        bytes_accessed=n_padded * in_bytes_per_elem
        + num_blocks * 8 * lane_width * 4,
    )

    # Scoped VMEM sized to the chosen tiles (double-buffered) plus margin.
    block_in_bytes = tile_rows * lane_width * in_bytes_per_elem
    block_out_bytes = 8 * lane_width * 4
    vmem_limit = 2 * (block_in_bytes + block_out_bytes) + (4 << 20)
    vmem_limit = int(min(max(vmem_limit, 16 << 20), 64 << 20))

    partials = pl.pallas_call(
        kernel,
        out_shape=jax.ShapeDtypeStruct((num_blocks * 8, lane_width),
                                       jnp.float32),
        grid_spec=pltpu.PrefetchScalarGridSpec(
            num_scalar_prefetch=1,
            grid=(num_blocks,),
            in_specs=[
                pl.BlockSpec((tile_rows, lane_width), lambda i, fnr: (i, 0)),
                pl.BlockSpec((tile_rows, lane_width), lambda i, fnr: (i, 0)),
            ],
            out_specs=pl.BlockSpec((8, lane_width), lambda i, fnr: (i, 0)),
        ),
        compiler_params=pltpu.CompilerParams(
            dimension_semantics=("parallel",),
            vmem_limit_bytes=vmem_limit,
        ),
        cost_estimate=cost,
    )(fnr_arr, yp_slab, yt_slab)

    # Tiny final reduction + mean outside the kernel (keeps the grid parallel).
    return jnp.sum(partials) / jnp.float32(n)


def _reference(y_pred, y_true, val_fnr, true_data_count, bf_memory,
               epsilon=1e-8):
    yp = jax.nn.sigmoid(y_pred)
    denom = yp - yp * y_true + true_data_count * val_fnr
    denom = jnp.maximum(denom, epsilon)
    bf_rate = jnp.power(2.0, -(bf_memory / denom * jnp.log(2.0)))
    bf_rate = jnp.clip(bf_rate, epsilon, 1.0 - epsilon)
    yp_adj = jnp.where(yp < 0.5, yp + bf_rate / 2, yp)
    bce = -(y_true * jnp.log(yp_adj) + (1 - y_true) * jnp.log(1 - yp_adj))
    return jnp.mean(bce)


if __name__ == "__main__":
    key = jax.random.PRNGKey(0)
    k1, k2, k3 = jax.random.split(key, 3)

    M, D = 64, 128
    y_pred = jax.random.normal(k1, (M, D), jnp.float32)                  # logits
    y_true_hard = (jax.random.uniform(k2, (M, D)) > 0.5).astype(jnp.float32)
    y_true_soft = jax.random.uniform(k3, (M, D), jnp.float32)
    val_fnr = 0.05
    true_data_count = 100.0
    bf_memory = 1024.0

    ref_hard = _reference(y_pred, y_true_hard, val_fnr, true_data_count, bf_memory)
    ref_soft = _reference(y_pred, y_true_soft, val_fnr, true_data_count, bf_memory)

    # 1) Default path (soft-label-safe two-log BCE), auto lane width / tiles.
    loss = jax.block_until_ready(
        fpr_loss_1(y_pred, y_true_hard, val_fnr,
                   true_data_count=true_data_count, bf_memory=bf_memory))
    assert jnp.allclose(loss, ref_hard, rtol=3e-5, atol=1e-6), (loss, ref_hard)

    # 2) Hard-label single-log fast path.
    loss_fast = jax.block_until_ready(
        fpr_loss_1(y_pred, y_true_hard, val_fnr,
                   true_data_count=true_data_count, bf_memory=bf_memory,
                   soft_labels=False))
    assert jnp.allclose(loss_fast, ref_hard, rtol=3e-5, atol=1e-6), (loss_fast, ref_hard)

    # 3) Soft labels (two-log form required for correctness).
    loss_soft = jax.block_until_ready(
        fpr_loss_1(y_pred, y_true_soft, val_fnr,
                   true_data_count=true_data_count, bf_memory=bf_memory,
                   soft_labels=True))
    assert jnp.allclose(loss_soft, ref_soft, rtol=3e-5, atol=1e-6), (loss_soft, ref_soft)

    # 4) Multi-block parallel grid (narrow lanes + small tiles).
    loss_tiled = jax.block_until_ready(
        fpr_loss_1(y_pred, y_true_hard, val_fnr,
                   true_data_count=true_data_count, bf_memory=bf_memory,
                   lane_width=128, tile_rows=16))
    assert jnp.allclose(loss_tiled, ref_hard, rtol=3e-5, atol=1e-6), (loss_tiled, ref_hard)

    # 5) Ragged shape -> lane padding + last-block tail mask path.
    yp_r = jax.random.normal(k1, (7, 33), jnp.float32)
    yt_r = (jax.random.uniform(k2, (7, 33)) > 0.5).astype(jnp.float32)
    ref_r = _reference(yp_r, yt_r, val_fnr, true_data_count, bf_memory)
    loss_r = jax.block_until_ready(
        fpr_loss_1(yp_r, yt_r, val_fnr,
                   true_data_count=true_data_count, bf_memory=bf_memory))
    assert jnp.allclose(loss_r, ref_r, rtol=3e-5, atol=1e-6), (loss_r, ref_r)

    print("KERNEL_OK")
</pallas_src>

<mosaic_0001>
module attributes {stable_mosaic.version = 11 : i64} {
  func.func @_fpr_loss_kernel(%arg0: i32, %arg1: memref<1xf32, #tpu.memory_space<smem>>, %arg2: memref<8x1024xf32, #tpu.memory_space<vmem>>, %arg3: memref<8x1024xf32, #tpu.memory_space<vmem>>, %arg4: memref<8x1024xf32, #tpu.memory_space<vmem>>) attributes {dimension_semantics = [#tpu.dimension_semantics<parallel>], iteration_bounds = array<i64: 1>, scalar_prefetch = 1 : i64, scratch_operands = 0 : i64, tpu.core_type = #tpu.core_type<tc>, window_params = [{transform_indices = @transform_0, window_bounds = array<i64: 8, 1024>}, {transform_indices = @transform_1, window_bounds = array<i64: 8, 1024>}, {transform_indices = @transform_2, window_bounds = array<i64: 8, 1024>}]} {
    %c0 = arith.constant 0 : index
    %c0_0 = arith.constant 0 : index
    %0 = vector.load %arg2[%c0, %c0_0] : memref<8x1024xf32, #tpu.memory_space<vmem>>, vector<8x1024xf32>
    %c0_1 = arith.constant 0 : index
    %c0_2 = arith.constant 0 : index
    %1 = vector.load %arg3[%c0_1, %c0_2] : memref<8x1024xf32, #tpu.memory_space<vmem>>, vector<8x1024xf32>
    %c0_3 = arith.constant 0 : index
    %2 = memref.load %arg1[%c0_3] : memref<1xf32, #tpu.memory_space<smem>>
    %cst = arith.constant 1.000000e+02 : f32
    %3 = arith.mulf %cst, %2 : f32
    %cst_4 = arith.constant 5.000000e-01 : f32
    %4 = vector.broadcast %cst_4 : f32 to vector<8x1024xf32>
    %5 = arith.mulf %4, %0 : vector<8x1024xf32>
    %6 = math.tanh %5 : vector<8x1024xf32>
    %cst_5 = arith.constant 1.000000e+00 : f32
    %7 = vector.broadcast %cst_5 : f32 to vector<8x1024xf32>
    %8 = arith.addf %6, %7 : vector<8x1024xf32>
    %cst_6 = arith.constant 5.000000e-01 : f32
    %9 = vector.broadcast %cst_6 : f32 to vector<8x1024xf32>
    %10 = arith.mulf %9, %8 : vector<8x1024xf32>
    %cst_7 = arith.constant 1.000000e+00 : f32
    %11 = vector.broadcast %cst_7 : f32 to vector<8x1024xf32>
    %12 = arith.subf %11, %1 : vector<8x1024xf32>
    %13 = arith.mulf %10, %12 : vector<8x1024xf32>
    %14 = vector.broadcast %3 : f32 to vector<8x1024xf32>
    %15 = arith.addf %13, %14 : vector<8x1024xf32>
    %cst_8 = arith.constant 9.99999993E-9 : f32
    %16 = vector.broadcast %cst_8 : f32 to vector<8x1024xf32>
    %17 = arith.maximumf %15, %16 : vector<8x1024xf32>
    %18 = tpu.reciprocal %17 {approx = true} : vector<8x1024xf32> -> vector<8x1024xf32>
    %cst_9 = arith.constant -709.782714 : f32
    %19 = vector.broadcast %cst_9 : f32 to vector<8x1024xf32>
    %20 = arith.mulf %19, %18 : vector<8x1024xf32>
    %21 = math.exp2 %20 : vector<8x1024xf32>
    %cst_10 = arith.constant 9.99999993E-9 : f32
    %cst_11 = arith.constant 1.000000e+00 : f32
    %22 = vector.broadcast %cst_10 : f32 to vector<8x1024xf32>
    %23 = arith.maximumf %22, %21 : vector<8x1024xf32>
    %24 = vector.broadcast %cst_11 : f32 to vector<8x1024xf32>
    %25 = arith.minimumf %24, %23 : vector<8x1024xf32>
    %cst_12 = arith.constant 5.000000e-01 : f32
    %26 = vector.broadcast %cst_12 : f32 to vector<8x1024xf32>
    %27 = arith.cmpf olt, %10, %26 : vector<8x1024xf32>
    %cst_13 = arith.constant 5.000000e-01 : f32
    %28 = vector.broadcast %cst_13 : f32 to vector<8x1024xf32>
    %29 = arith.mulf %25, %28 : vector<8x1024xf32>
    %30 = arith.addf %10, %29 : vector<8x1024xf32>
    %31 = arith.select %27, %30, %10 : vector<8x1024xi1>, vector<8x1024xf32>
    %32 = math.log %31 : vector<8x1024xf32>
    %33 = arith.mulf %1, %32 : vector<8x1024xf32>
    %cst_14 = arith.constant 1.000000e+00 : f32
    %34 = vector.broadcast %cst_14 : f32 to vector<8x1024xf32>
    %35 = arith.subf %34, %31 : vector<8x1024xf32>
    %36 = math.log %35 : vector<8x1024xf32>
    %37 = arith.mulf %12, %36 : vector<8x1024xf32>
    %38 = arith.addf %33, %37 : vector<8x1024xf32>
    %cst_15 = arith.constant 0.000000e+00 : f32
    %39 = vector.broadcast %cst_15 : f32 to vector<8x1024xf32>
    %40 = arith.subf %39, %38 : vector<8x1024xf32>
    %41 = vector.shape_cast %40 : vector<8x1024xf32> to vector<1x8x1024xf32>
    %cst_16 = arith.constant dense<0.000000e+00> : vector<8x1024xf32>
    %42 = vector.multi_reduction <add>, %41, %cst_16 [0] : vector<1x8x1024xf32> to vector<8x1024xf32>
    %c0_17 = arith.constant 0 : index
    %c0_18 = arith.constant 0 : index
    %43 = vector.load %arg4[%c0_17, %c0_18] : memref<8x1024xf32, #tpu.memory_space<vmem>>, vector<8x1024xf32>
    tpu.vector_store %arg4[%c0_17, %c0_18], %42 {strides = array<i32>} : memref<8x1024xf32, #tpu.memory_space<vmem>>, vector<8x1024xf32>,
    return
  }
  func.func @transform_0(%arg0: i32, %arg1: memref<1xf32, #tpu.memory_space<smem>>) -> (i32, i32) {
    %c0_i32 = arith.constant 0 : i32
    %c0_i32_0 = arith.constant 0 : i32
    return %arg0, %c0_i32 : i32, i32
  }
  func.func @transform_1(%arg0: i32, %arg1: memref<1xf32, #tpu.memory_space<smem>>) -> (i32, i32) {
    %c0_i32 = arith.constant 0 : i32
    %c0_i32_0 = arith.constant 0 : i32
    return %arg0, %c0_i32 : i32, i32
  }
  func.func @transform_2(%arg0: i32, %arg1: memref<1xf32, #tpu.memory_space<smem>>) -> (i32, i32) {
    %c0_i32 = arith.constant 0 : i32
    %c0_i32_0 = arith.constant 0 : i32
    return %arg0, %c0_i32 : i32, i32
  }
}

</mosaic_0001>

<llo_original>
// kernel: tpu_custom_call.1
$region0: #{tpu_custom_call.1}
  #allocation0 [shape = 'u32[]', space=smem, size = 0x4, offset = 0x4, fixed_abs, tag = 'smem constant byte address 0x4 - core index']
  #allocation1 [shape = 'u32[144,128]{1,0:T(1,128)}', space=vmem, size = 0x12000, scoped, tag = 'internal scratch']
  #allocation2 [shape = 's32[1]{0}', space=sflag, size = 0x4, scoped, tag = 'scoped memory for tpu_custom_call.1']
  #allocation3 [shape = 'f32[1]{0:T(128)S(6)}', space=smem, size = 0x200, scoped, tag = 'prefetched SMEM operand 0']
  %s0 = inlined_call_operand.<no memory space> [shape: f32[1], index: 0, kind: input, shape index: {}]
  %s1 = inlined_call_operand.hbm [shape: f32[8,1024], index: 1, kind: input, shape index: {}]
  %s2 = inlined_call_operand.hbm [shape: f32[8,1024], index: 2, kind: input, shape index: {}]
  %s3 = inlined_call_operand.hbm [shape: f32[8,1024], index: 3, kind: output, shape index: {}]
  %s4 = sld [smem:[#allocation0]]
  $region26: #{tpu_custom_call.1} parent=0
    _
  %s6 = ssub.s32 1, %s4
  %s7 = scalar_select 0, %s6, %s4
  %8 = sst [smem:[#allocation3]] %s0
  $region1: #{tpu_custom_call.1} parent=0
    #allocation4 [shape = 'u8[32768]{0}', space=vmem, size = 0x8000, scoped, tag = 'input window, operand 1, single buffered']
    #allocation5 [shape = 's32[1]{0}', space=sflag, size = 0x4, scoped, tag = 'scoped memory for tpu_custom_call.1']
    #allocation6 [shape = 's32[1]{0}', space=sflag, size = 0x4, scoped, tag = 'scoped memory for tpu_custom_call.1']
    #allocation7 [shape = 'u8[32768]{0}', space=vmem, size = 0x8000, scoped, tag = 'input window, operand 2, single buffered']
    #allocation8 [shape = 's32[1]{0}', space=sflag, size = 0x4, scoped, tag = 'scoped memory for tpu_custom_call.1']
    #allocation9 [shape = 'u8[32768]{0}', space=vmem, size = 0x8000, scoped, tag = 'output window, operand 0, single buffered']
    %9 = vsyncpa [#allocation5], 0
    %10 = vsyncpa [#allocation8], 0
    %11 = vsyncpa [#allocation6], 0
    // Predicated region
    $region2: #{tpu_custom_call.1} parent=1 // pred_check
      _
    $region3: #{tpu_custom_call.1} parent=1 // pred_check_branch
      %13 = sbr.rel (0) target = $region5
    $region4: #{tpu_custom_call.1} parent=1 // pred_region
      %s15 = ssub.s32 1024, 1024
      %16 = vsyncadd [#allocation5], %s15
      %s18 = sshll.u32 [#allocation4], 4
      %s19 = int_to_ptr.vmem [resolvable:$true] %s18
      %21 = dma.hbm_to_vmem [thread:$0]  %s1, 1024, %s19, [#allocation5]
    $region5: #{tpu_custom_call.1} parent=1 // pred_fallthru
      _
    // Predicated region
    $region6: #{tpu_custom_call.1} parent=1 // pred_check
      _
    $region7: #{tpu_custom_call.1} parent=1 // pred_check_branch
      %23 = sbr.rel (0) target = $region9
    $region8: #{tpu_custom_call.1} parent=1 // pred_region
      %s25 = ssub.s32 1024, 1024
      %26 = vsyncadd [#allocation8], %s25
      %s28 = sshll.u32 [#allocation7], 4
      %s29 = int_to_ptr.vmem [resolvable:$true] %s28
      %31 = dma.hbm_to_vmem [thread:$0]  %s2, 1024, %s29, [#allocation8]
    $region9: #{tpu_custom_call.1} parent=1 // pred_fallthru
      _
    // Predicated region
    $region10: #{tpu_custom_call.1} parent=1 // pred_check
      _
    $region11: #{tpu_custom_call.1} parent=1 // pred_check_branch
      %33 = sbr.rel (0) target = $region13
    $region12: #{tpu_custom_call.1} parent=1 // pred_region
      %34 = dma.done [#allocation5], 1024
    $region13: #{tpu_custom_call.1} parent=1 // pred_fallthru
      _
    // Predicated region
    $region14: #{tpu_custom_call.1} parent=1 // pred_check
      _
    $region15: #{tpu_custom_call.1} parent=1 // pred_check_branch
      %36 = sbr.rel (0) target = $region17
    $region16: #{tpu_custom_call.1} parent=1 // pred_region
      %37 = dma.done [#allocation8], 1024
    $region17: #{tpu_custom_call.1} parent=1 // pred_fallthru
      _
    %v38 = vld [vmem:[#allocation4] sm:$0xff]
    %v39 = vld [vmem:[#allocation4 + $0x8] sm:$0xff]
    %v40 = vld [vmem:[#allocation4 + $0x10] sm:$0xff]
    %v41 = vld [vmem:[#allocation4 + $0x18] sm:$0xff]
    %v42 = vld [vmem:[#allocation4 + $0x20] sm:$0xff]
    %v43 = vld [vmem:[#allocation4 + $0x28] sm:$0xff]
    %v44 = vld [vmem:[#allocation4 + $0x30] sm:$0xff]
    %v45 = vld [vmem:[#allocation4 + $0x38] sm:$0xff]
    %v46 = vld [vmem:[#allocation7] sm:$0xff]
    %v47 = vld [vmem:[#allocation7 + $0x8] sm:$0xff]
    %v48 = vld [vmem:[#allocation7 + $0x10] sm:$0xff]
    %v49 = vld [vmem:[#allocation7 + $0x18] sm:$0xff]
    %v50 = vld [vmem:[#allocation7 + $0x20] sm:$0xff]
    %v51 = vld [vmem:[#allocation7 + $0x28] sm:$0xff]
    %v52 = vld [vmem:[#allocation7 + $0x30] sm:$0xff]
    %v53 = vld [vmem:[#allocation7 + $0x38] sm:$0xff]
    %s54 = sld [smem:[#allocation3]]
    %s55 = smul.f32 %s54, 100.0
    %v56 = vmul.f32 %v38, 0.5
    %v57 = vmul.f32 %v39, 0.5
    %v58 = vmul.f32 %v40, 0.5
    %v59 = vmul.f32 %v41, 0.5
    %v60 = vmul.f32 %v42, 0.5
    %v61 = vmul.f32 %v43, 0.5
    %v62 = vmul.f32 %v44, 0.5
    %v63 = vmul.f32 %v45, 0.5
    %v64 = vtanh.pop %v56
    %v65 = vtanh.pop %v57
    %v66 = vtanh.pop %v58
    %v67 = vtanh.pop %v59
    %v68 = vtanh.pop %v60
    %v69 = vtanh.pop %v61
    %v70 = vtanh.pop %v62
    %v71 = vtanh.pop %v63
    %v72 = vadd.f32 %v64, 1.0
    %v73 = vadd.f32 %v65, 1.0
    %v74 = vadd.f32 %v66, 1.0
    %v75 = vadd.f32 %v67, 1.0
    %v76 = vadd.f32 %v68, 1.0
    %v77 = vadd.f32 %v69, 1.0
    %v78 = vadd.f32 %v70, 1.0
    %v79 = vadd.f32 %v71, 1.0
    %v80 = vmul.f32 %v72, 0.5
    %v81 = vmul.f32 %v73, 0.5
    %v82 = vmul.f32 %v74, 0.5
    %v83 = vmul.f32 %v75, 0.5
    %v84 = vmul.f32 %v76, 0.5
    %v85 = vmul.f32 %v77, 0.5
    %v86 = vmul.f32 %v78, 0.5
    %v87 = vmul.f32 %v79, 0.5
    %v88 = vsub.f32 1.0, %v46
    %v89 = vsub.f32 1.0, %v47
    %v90 = vsub.f32 1.0, %v48
    %v91 = vsub.f32 1.0, %v49
    %v92 = vsub.f32 1.0, %v50
    %v93 = vsub.f32 1.0, %v51
    %v94 = vsub.f32 1.0, %v52
    %v95 = vsub.f32 1.0, %v53
    %v96 = vmul.f32 %v80, %v88
    %v97 = vmul.f32 %v81, %v89
    %v98 = vmul.f32 %v82, %v90
    %v99 = vmul.f32 %v83, %v91
    %v100 = vmul.f32 %v84, %v92
    %v101 = vmul.f32 %v85, %v93
    %v102 = vmul.f32 %v86, %v94
    %v103 = vmul.f32 %v87, %v95
    %v104 = vstv %s55
    %v105 = vadd.f32 %v96, %v104
    %v106 = vadd.f32 %v97, %v104
    %v107 = vadd.f32 %v98, %v104
    %v108 = vadd.f32 %v99, %v104
    %v109 = vadd.f32 %v100, %v104
    %v110 = vadd.f32 %v101, %v104
    %v111 = vadd.f32 %v102, %v104
    %v112 = vadd.f32 %v103, %v104
    %v113 = vmax.f32 %v105, 1e-08
    %v114 = vmax.f32 %v106, 1e-08
    %v115 = vmax.f32 %v107, 1e-08
    %v116 = vmax.f32 %v108, 1e-08
    %v117 = vmax.f32 %v109, 1e-08
    %v118 = vmax.f32 %v110, 1e-08
    %v119 = vmax.f32 %v111, 1e-08
    %v120 = vmax.f32 %v112, 1e-08
    %v121 = vrcp.pop %v113
    %v122 = vrcp.pop %v114
    %v123 = vrcp.pop %v115
    %v124 = vrcp.pop %v116
    %v125 = vrcp.pop %v117
    %v126 = vrcp.pop %v118
    %v127 = vrcp.pop %v119
    %v128 = vrcp.pop %v120
    %v129 = vmul.f32 %v121, -709.7827
    %v130 = vmul.f32 %v122, -709.7827
    %v131 = vmul.f32 %v123, -709.7827
    %v132 = vmul.f32 %v124, -709.7827
    %v133 = vmul.f32 %v125, -709.7827
    %v134 = vmul.f32 %v126, -709.7827
    %v135 = vmul.f32 %v127, -709.7827
    %v136 = vmul.f32 %v128, -709.7827
    %v137 = vpow.pop %v129
    %v138 = vpow.pop %v130
    %v139 = vpow.pop %v131
    %v140 = vpow.pop %v132
    %v141 = vpow.pop %v133
    %v142 = vpow.pop %v134
    %v143 = vpow.pop %v135
    %v144 = vpow.pop %v136
    %v145 = vmax.f32 %v137, 1e-08
    %v146 = vmax.f32 %v138, 1e-08
    %v147 = vmax.f32 %v139, 1e-08
    %v148 = vmax.f32 %v140, 1e-08
    %v149 = vmax.f32 %v141, 1e-08
    %v150 = vmax.f32 %v142, 1e-08
    %v151 = vmax.f32 %v143, 1e-08
    %v152 = vmax.f32 %v144, 1e-08
    %v153 = vmin.f32 %v145, 1.0
    %v154 = vmin.f32 %v146, 1.0
    %v155 = vmin.f32 %v147, 1.0
    %v156 = vmin.f32 %v148, 1.0
    %v157 = vmin.f32 %v149, 1.0
    %v158 = vmin.f32 %v150, 1.0
    %v159 = vmin.f32 %v151, 1.0
    %v160 = vmin.f32 %v152, 1.0
    %vm161 = vcmp.lt.f32.partialorder %v80, 0.5
    %vm162 = vcmp.lt.f32.partialorder %v81, 0.5
    %vm163 = vcmp.lt.f32.partialorder %v82, 0.5
    %vm164 = vcmp.lt.f32.partialorder %v83, 0.5
    %vm165 = vcmp.lt.f32.partialorder %v84, 0.5
    %vm166 = vcmp.lt.f32.partialorder %v85, 0.5
    %vm167 = vcmp.lt.f32.partialorder %v86, 0.5
    %vm168 = vcmp.lt.f32.partialorder %v87, 0.5
    %v169 = vmul.f32 %v153, 0.5
    %v170 = vmul.f32 %v154, 0.5
    %v171 = vmul.f32 %v155, 0.5
    %v172 = vmul.f32 %v156, 0.5
    %v173 = vmul.f32 %v157, 0.5
    %v174 = vmul.f32 %v158, 0.5
    %v175 = vmul.f32 %v159, 0.5
    %v176 = vmul.f32 %v160, 0.5
    %v177 = vadd.f32 %v80, %v169
    %v178 = vadd.f32 %v81, %v170
    %v179 = vadd.f32 %v82, %v171
    %v180 = vadd.f32 %v83, %v172
    %v181 = vadd.f32 %v84, %v173
    %v182 = vadd.f32 %v85, %v174
    %v183 = vadd.f32 %v86, %v175
    %v184 = vadd.f32 %v87, %v176
    %v185 = vsel %vm161, %v177, %v80
    %v186 = vsel %vm162, %v178, %v81
    %v187 = vsel %vm163, %v179, %v82
    %v188 = vsel %vm164, %v180, %v83
    %v189 = vsel %vm165, %v181, %v84
    %v190 = vsel %vm166, %v182, %v85
    %v191 = vsel %vm167, %v183, %v86
    %v192 = vsel %vm168, %v184, %v87
    %v193 = vlog2.pop %v185
    %v194 = vmul.f32 %v193, 0.6931472
    %v195 = vlog2.pop %v186
    %v196 = vmul.f32 %v195, 0.6931472
    %v197 = vlog2.pop %v187
    %v198 = vmul.f32 %v197, 0.6931472
    %v199 = vlog2.pop %v188
    %v200 = vmul.f32 %v199, 0.6931472
    %v201 = vlog2.pop %v189
    %v202 = vmul.f32 %v201, 0.6931472
    %v203 = vlog2.pop %v190
    %v204 = vmul.f32 %v203, 0.6931472
    %v205 = vlog2.pop %v191
    %v206 = vmul.f32 %v205, 0.6931472
    %v207 = vlog2.pop %v192
    %v208 = vmul.f32 %v207, 0.6931472
    %v209 = vmul.f32 %v46, %v194
    %v210 = vmul.f32 %v47, %v196
    %v211 = vmul.f32 %v48, %v198
    %v212 = vmul.f32 %v49, %v200
    %v213 = vmul.f32 %v50, %v202
    %v214 = vmul.f32 %v51, %v204
    %v215 = vmul.f32 %v52, %v206
    %v216 = vmul.f32 %v53, %v208
    %v217 = vsub.f32 1.0, %v185
    %v218 = vsub.f32 1.0, %v186
    %v219 = vsub.f32 1.0, %v187
    %v220 = vsub.f32 1.0, %v188
    %v221 = vsub.f32 1.0, %v189
    %v222 = vsub.f32 1.0, %v190
    %v223 = vsub.f32 1.0, %v191
    %v224 = vsub.f32 1.0, %v192
    %v225 = vlog2.pop %v217
    %v226 = vmul.f32 %v225, 0.6931472
    %v227 = vlog2.pop %v218
    %v228 = vmul.f32 %v227, 0.6931472
    %v229 = vlog2.pop %v219
    %v230 = vmul.f32 %v229, 0.6931472
    %v231 = vlog2.pop %v220
    %v232 = vmul.f32 %v231, 0.6931472
    %v233 = vlog2.pop %v221
    %v234 = vmul.f32 %v233, 0.6931472
    %v235 = vlog2.pop %v222
    %v236 = vmul.f32 %v235, 0.6931472
    %v237 = vlog2.pop %v223
    %v238 = vmul.f32 %v237, 0.6931472
    %v239 = vlog2.pop %v224
    %v240 = vmul.f32 %v239, 0.6931472
    %v241 = vmul.f32 %v88, %v226
    %v242 = vmul.f32 %v89, %v228
    %v243 = vmul.f32 %v90, %v230
    %v244 = vmul.f32 %v91, %v232
    %v245 = vmul.f32 %v92, %v234
    %v246 = vmul.f32 %v93, %v236
    %v247 = vmul.f32 %v94, %v238
    %v248 = vmul.f32 %v95, %v240
    %v249 = vadd.f32 %v209, %v241
    %v250 = vadd.f32 %v210, %v242
    %v251 = vadd.f32 %v211, %v243
    %v252 = vadd.f32 %v212, %v244
    %v253 = vadd.f32 %v213, %v245
    %v254 = vadd.f32 %v214, %v246
    %v255 = vadd.f32 %v215, %v247
    %v256 = vadd.f32 %v216, %v248
    %v257 = vsub.f32 0.0, %v249
    %v258 = vsub.f32 0.0, %v250
    %v259 = vsub.f32 0.0, %v251
    %v260 = vsub.f32 0.0, %v252
    %v261 = vsub.f32 0.0, %v253
    %v262 = vsub.f32 0.0, %v254
    %v263 = vsub.f32 0.0, %v255
    %v264 = vsub.f32 0.0, %v256
    %v265 = vadd.f32 %v257, 0.0
    %v266 = vadd.f32 %v258, 0.0
    %v267 = vadd.f32 %v259, 0.0
    %v268 = vadd.f32 %v260, 0.0
    %v269 = vadd.f32 %v261, 0.0
    %v270 = vadd.f32 %v262, 0.0
    %v271 = vadd.f32 %v263, 0.0
    %v272 = vadd.f32 %v264, 0.0
    %273 = vst [vmem:[#allocation9] sm:$0xff] %v265
    %274 = vst [vmem:[#allocation9 + $0x8] sm:$0xff] %v266
    %275 = vst [vmem:[#allocation9 + $0x10] sm:$0xff] %v267
    %276 = vst [vmem:[#allocation9 + $0x18] sm:$0xff] %v268
    %277 = vst [vmem:[#allocation9 + $0x20] sm:$0xff] %v269
    %278 = vst [vmem:[#allocation9 + $0x28] sm:$0xff] %v270
    %279 = vst [vmem:[#allocation9 + $0x30] sm:$0xff] %v271
    %280 = vst [vmem:[#allocation9 + $0x38] sm:$0xff] %v272
    // Predicated region
    $region18: #{tpu_custom_call.1} parent=1 // pred_check
      _
    $region19: #{tpu_custom_call.1} parent=1 // pred_check_branch
      %282 = sbr.rel (0) target = $region21
    $region20: #{tpu_custom_call.1} parent=1 // pred_region
      %s284 = ssub.s32 1024, 1024
      %285 = vsyncadd [#allocation6], %s284
      %s287 = sshll.u32 [#allocation9], 4
      %s288 = int_to_ptr.vmem [resolvable:$true] %s287
      %290 = dma.vmem_to_hbm [thread:$0]  %s288, 1024, %s3, [#allocation6]
    $region21: #{tpu_custom_call.1} parent=1 // pred_fallthru
      _
    // Predicated region
    $region22: #{tpu_custom_call.1} parent=1 // pred_check
      _
    $region23: #{tpu_custom_call.1} parent=1 // pred_check_branch
      %292 = sbr.rel (0) target = $region25
    $region24: #{tpu_custom_call.1} parent=1 // pred_region
      %293 = dma.done [#allocation6], 1024
    $region25: #{tpu_custom_call.1} parent=1 // pred_fallthru
      _
    %294 = vsyncpa [#allocation5], 1
    %295 = vsyncpa [#allocation8], 1
    %296 = vsyncpa [#allocation6], 1

</llo_original>
